<compile_context>
chip_gen: v5e
topology: v5e:2x2
jax: 0.10.0
libtpu: 0.0.40
codegen_flags: <defaults>
</compile_context>

<pallas_src>
import functools
import math

import jax
import jax.numpy as jnp
from jax.experimental import pallas as pl
from jax.experimental.pallas import tpu as pltpu

F32 = jnp.float32
BF16 = jnp.bfloat16


def _mish(x):
    return x * jnp.tanh(jax.nn.softplus(x))


# ----------------------------------------------------------------------------
# In-kernel building blocks (operate on traced values / refs, channels-last)
# ----------------------------------------------------------------------------
def _conv_block(x, w_ref, b, gamma, beta, sel, selavg, K):
    """Conv1d('same', K taps) -> GroupNorm(8) -> Mish.  x: [L, C_in] f32."""
    L, C_in = x.shape
    pad = K // 2
    z = jnp.zeros((pad, C_in), F32)
    xp = jnp.concatenate([z, x, z], axis=0).astype(BF16)         # [L+2p, C_in]
    C_out = b.shape[-1]
    acc = jnp.zeros((L, C_out), F32)
    for k in range(K):                                           # lane-dense dots
        acc = acc + jnp.dot(xp[k:k + L, :], w_ref[k],
                            preferred_element_type=F32)
    y = acc + b                                                  # [L, C_out]

    # GroupNorm(8), centered two-pass; group stats via row-oriented selector dots.
    s1 = jnp.sum(y, axis=0, keepdims=True)                       # [1, C]
    gmean = jnp.dot(s1, selavg, preferred_element_type=F32)      # [1, G]
    mean_c = jnp.dot(gmean, sel, preferred_element_type=F32)     # [1, C]
    d = y - mean_c
    gvar = jnp.dot(jnp.sum(d * d, axis=0, keepdims=True), selavg,
                   preferred_element_type=F32)                   # [1, G]
    inv_c = jnp.dot(jax.lax.rsqrt(gvar + 1e-5), sel,
                    preferred_element_type=F32)                  # [1, C]
    y = d * inv_c * gamma + beta
    return _mish(y)


def _linear_attention_residual(h, x_in, wqkv_ref, wout_ref, bout, wres, bres,
                               heads, dim_head):
    """Residual(LinearAttention)(h) + residual_conv(x_in).  h: [L, C] f32."""
    hb = h.astype(BF16)
    scale = dim_head ** -0.5
    acc = h + bout                                               # residual + to_out bias
    for hh in range(heads):
        q = jnp.dot(hb, wqkv_ref[hh], preferred_element_type=F32) * scale
        k = jnp.dot(hb, wqkv_ref[heads + hh], preferred_element_type=F32)
        v = jnp.dot(hb, wqkv_ref[2 * heads + hh], preferred_element_type=F32)
        k = jax.nn.softmax(k, axis=0)                            # softmax over sequence
        ctx = jnp.dot(k.T, v, preferred_element_type=F32)        # [d, d]
        out_h = jnp.dot(q, ctx, preferred_element_type=F32)      # [L, d]
        acc = acc + jnp.dot(out_h.astype(BF16), wout_ref[hh],
                            preferred_element_type=F32)
    if wres is None:                                             # identity residual conv
        return acc + x_in
    return acc + jnp.dot(x_in.astype(BF16), wres,
                         preferred_element_type=F32) + bres


def _downsample_s2(x, dw_ref, db, L_out):
    """Conv1d(C, C, 3, stride=2, padding=1) computed directly at stride 2."""
    L, C = x.shape
    z = jnp.zeros((1, C), F32)
    xp = jnp.concatenate([z, x, z], axis=0).astype(BF16)         # [L+2, C]
    acc = jnp.zeros((L_out, db.shape[-1]), F32) + db
    for k in range(3):
        rows = jnp.concatenate(
            [xp[2 * j + k:2 * j + k + 1, :] for j in range(L_out)], axis=0)
        acc = acc + jnp.dot(rows, dw_ref[k], preferred_element_type=F32)
    return acc


# ----------------------------------------------------------------------------
# Fused per-level kernel: res-block 1 + res-block 2 + downsample (one batch elt)
# ----------------------------------------------------------------------------
def _level_kernel(*refs, K, heads, dim_head, res1_proj, res2_proj):
    out_ref = refs[-1]
    it = iter(refs[:-1])
    t_ref = next(it)
    x_ref = next(it)
    sel = next(it)[...]                                          # [G, C_out] f32
    selavg = next(it)[...]                                       # [C_out, G] f32 (1/(cg*L))

    t = t_ref[0]                                                 # [1, time_dim]
    tmish_b = _mish(t).astype(BF16)                              # shared by both blocks
    x = x_ref[0]                                                 # [L, C_in]

    def residual_temporal_block(x_in, has_proj):
        tw = next(it)[...]
        tb = next(it)[...]
        tbias = jnp.dot(tmish_b, tw, preferred_element_type=F32) + tb   # [1, C_out]
        c0w = next(it)
        c0b, c0g, c0be = next(it)[...], next(it)[...], next(it)[...]
        h = _conv_block(x_in, c0w, c0b, c0g, c0be, sel, selavg, K) + tbias
        c1w = next(it)
        c1b, c1g, c1be = next(it)[...], next(it)[...], next(it)[...]
        h = _conv_block(h, c1w, c1b, c1g, c1be, sel, selavg, K)
        wqkv_ref = next(it)
        wout_ref = next(it)
        bout = next(it)[...]
        if has_proj:
            wres, bres = next(it)[...], next(it)[...]
        else:
            wres, bres = None, None
        return _linear_attention_residual(h, x_in, wqkv_ref, wout_ref, bout,
                                          wres, bres, heads, dim_head)

    h = residual_temporal_block(x, res1_proj)
    h = residual_temporal_block(h, res2_proj)
    dw_ref = next(it)
    db = next(it)[...]
    out_ref[0] = _downsample_s2(h, dw_ref, db, out_ref.shape[1])


def _const_idx(nd):
    return {1: (lambda b: (0,)),
            2: (lambda b: (0, 0)),
            3: (lambda b: (0, 0, 0))}[nd]


def level_forward(t3, x, lp, *, K, heads, dim_head):
    """t3: [B, 1, time_dim], x: [B, L, C_in] -> [B, L_out, C_out]."""
    B, L, C_in = x.shape
    C_out, L_out = lp["C_out"], lp["L_out"]
    dim = t3.shape[-1]

    inputs = ([t3, x, lp["sel"], lp["selavg"]]
              + lp["res1"] + lp["res2"] + [lp["down_w"], lp["down_b"]])
    in_specs = [pl.BlockSpec((1, 1, dim), lambda b: (b, 0, 0)),
                pl.BlockSpec((1, L, C_in), lambda b: (b, 0, 0))]
    for arr in inputs[2:]:
        in_specs.append(pl.BlockSpec(arr.shape, _const_idx(arr.ndim)))

    kernel = functools.partial(_level_kernel, K=K, heads=heads, dim_head=dim_head,
                               res1_proj=lp["res1_proj"], res2_proj=lp["res2_proj"])
    return pl.pallas_call(
        kernel,
        out_shape=jax.ShapeDtypeStruct((B, L_out, C_out), F32),
        grid=(B,),
        in_specs=in_specs,
        out_specs=pl.BlockSpec((1, L_out, C_out), lambda b: (b, 0, 0)),
        compiler_params=pltpu.CompilerParams(
            dimension_semantics=("parallel",)),                  # 2x on v7x megacore
    )(*inputs)


# ----------------------------------------------------------------------------
# Time embedding MLP (sinusoidal emb fused in-kernel) and final head
# ----------------------------------------------------------------------------
def _time_mlp_kernel(time_ref, freq_ref, phase_ref, w1_ref, b1_ref,
                     w2_ref, b2_ref, o_ref):
    # cat(sin(t*f), cos(t*f)) expressed concat-free as sin(t*[f,f] + [0, pi/2])
    emb = jnp.sin(time_ref[...] * freq_ref[...] + phase_ref[...])        # [B, dim]
    h = jnp.dot(emb.astype(BF16), w1_ref[...],
                preferred_element_type=F32) + b1_ref[...]
    h = _mish(h)
    o_ref[...] = jnp.dot(h.astype(BF16), w2_ref[...],
                         preferred_element_type=F32) + b2_ref[...]


def time_mlp_forward(time, p):
    B = time.shape[0]
    dim = p["w2"].shape[-1]
    return pl.pallas_call(
        _time_mlp_kernel,
        out_shape=jax.ShapeDtypeStruct((B, dim), F32),
    )(time.reshape(B, 1).astype(F32), p["freq"], p["phase"],
      p["w1"], p["b1"], p["w2"], p["b2"])


def _final_kernel(xf_ref, t_ref, w1x_ref, w1t_ref, b1_ref, w2_ref, b2_ref, o_ref):
    # Linear(fc_dim + time_dim, .) with the concat folded into two dots.
    h = (jnp.dot(xf_ref[...].astype(BF16), w1x_ref[...], preferred_element_type=F32)
         + jnp.dot(t_ref[...].astype(BF16), w1t_ref[...], preferred_element_type=F32)
         + b1_ref[...])
    h = _mish(h)
    o_ref[...] = jnp.dot(h.astype(BF16), w2_ref[...],
                         preferred_element_type=F32) + b2_ref[...]


def final_forward(xf, t, p):
    B = xf.shape[0]
    out_dim = p["w2"].shape[-1]
    return pl.pallas_call(
        _final_kernel,
        out_shape=jax.ShapeDtypeStruct((B, out_dim), F32),
    )(xf, t, p["w1x"], p["w1t"], p["b1"], p["w2"], p["b2"])


# ----------------------------------------------------------------------------
# Forward pass (6 pallas_calls total)
# ----------------------------------------------------------------------------
def temporal_value_forward(params, x, time, cond=None):
    """x: [B, horizon, transition], time: [B] -> [B, out_dim].  cond unused."""
    B = x.shape[0]
    # PyTorch rearranges 'b h t -> b t h' (NCW); we keep channels-last [B, L, C]
    # inside the kernels (lane-dense), so no transpose is needed here.
    t = time_mlp_forward(time, params["time_mlp"])               # [B, time_dim]
    t3 = t.reshape(B, 1, -1)
    h = x.astype(F32)
    for lp in params["levels"]:
        h = level_forward(t3, h, lp, K=params["kernel_size"],
                          heads=params["heads"], dim_head=params["dim_head"])
    # match PyTorch .view(B, -1) on NCW: channel-major flatten
    xf = jnp.transpose(h, (0, 2, 1)).reshape(B, -1)
    return final_forward(xf, t, params["final"])


# ----------------------------------------------------------------------------
# Parameter construction (random init; layouts are transposed/tap-major versions
# of the PyTorch weights for kernel-friendly indexing)
# ----------------------------------------------------------------------------
def build_params(key, horizon, d_in, dim=32, dim_mults=(1, 2, 4, 8), out_dim=1,
                 heads=4, dim_head=32, n_groups=8, kernel_size=5):
    dims = [d_in] + [dim * m for m in dim_mults]
    in_out = list(zip(dims[:-1], dims[1:]))
    hidden = heads * dim_head
    keys = iter(jax.random.split(key, 4096))

    def nrm(shape, dtype=BF16, scale=0.05):
        return (scale * jax.random.normal(next(keys), shape, F32)).astype(dtype)

    half = dim // 2
    freqs = jnp.exp(jnp.arange(half, dtype=F32)
                    * -(math.log(10000.0) / (half - 1)))
    params = {
        "dim": dim, "heads": heads, "dim_head": dim_head, "kernel_size": kernel_size,
        "time_mlp": {
            "freq": jnp.concatenate([freqs, freqs])[None, :],
            "phase": jnp.concatenate([jnp.zeros((half,), F32),
                                      jnp.full((half,), math.pi / 2, F32)])[None, :],
            "w1": nrm((dim, dim * 4)), "b1": nrm((1, dim * 4), F32),
            "w2": nrm((dim * 4, dim)), "b2": nrm((1, dim), F32),
        },
    }

    def resblock(ci, co):
        prm = [
            nrm((dim, co)), nrm((1, co), F32),                      # time-bias linear
            nrm((kernel_size, ci, co)), nrm((1, co), F32),          # conv block 0 (tap-major)
            jnp.ones((1, co), F32), jnp.zeros((1, co), F32),        #   GN gamma / beta
            nrm((kernel_size, co, co)), nrm((1, co), F32),          # conv block 1
            jnp.ones((1, co), F32), jnp.zeros((1, co), F32),
            nrm((3 * heads, co, dim_head)),                         # to_qkv (q|k|v per head)
            nrm((heads, dim_head, co)),                             # to_out per head
            nrm((1, co), F32),                                      # to_out bias
        ]
        proj = ci != co
        if proj:
            prm += [nrm((ci, co)), nrm((1, co), F32)]               # residual 1x1 conv
        return prm, proj

    levels = []
    L = horizon
    for ci, co in in_out:
        cg = co // n_groups
        sel = (jnp.arange(co)[None, :] // cg
               == jnp.arange(n_groups)[:, None]).astype(F32)        # [G, co]
        r1, p1 = resblock(ci, co)
        r2, p2 = resblock(co, co)
        L_out = (L - 1) // 2 + 1                                     # conv1d(k=3,s=2,p=1)
        levels.append({
            "C_out": co, "L": L, "L_out": L_out,
            "sel": sel, "selavg": sel.T / float(cg * L),
            "res1": r1, "res1_proj": p1,
            "res2": r2, "res2_proj": p2,
            "down_w": nrm((3, co, co)), "down_b": nrm((1, co), F32),
        })
        L = L_out
    params["levels"] = levels

    h_track = horizon
    for _ in in_out:
        h_track //= 2
    fc_dim = dims[-1] * max(h_track, 1)
    assert fc_dim == dims[-1] * L, "final flatten size mismatch vs PyTorch fc_dim"
    params["final"] = {
        "w1x": nrm((fc_dim, fc_dim // 2)), "w1t": nrm((dim, fc_dim // 2)),
        "b1": nrm((1, fc_dim // 2), F32),
        "w2": nrm((fc_dim // 2, out_dim)), "b2": nrm((1, out_dim), F32),
    }
    return params


# ----------------------------------------------------------------------------
if __name__ == "__main__":
    key = jax.random.PRNGKey(0)
    kx, kt, kp = jax.random.split(key, 3)

    B, HORIZON, D_IN = 2, 8, 4                 # x : [batch, horizon, transition]
    x = jax.random.normal(kx, (B, HORIZON, D_IN), dtype=F32)
    time = jax.random.uniform(kt, (B,), dtype=F32) * 10.0
    cond = None                                # unused by TemporalValue.forward

    params = build_params(kp, horizon=HORIZON, d_in=D_IN, dim=32, out_dim=1)

    out = temporal_value_forward(params, x, time, cond)
    out = jax.block_until_ready(out)
    assert out.shape == (B, 1), out.shape
    assert bool(jnp.all(jnp.isfinite(out)))
    print("KERNEL_OK")
</pallas_src>

<mosaic_0001>
module attributes {stable_mosaic.version = 11 : i64} {
  func.func @_time_mlp_kernel(%arg0: memref<2x1xf32, #tpu.memory_space<vmem>>, %arg1: memref<1x32xf32, #tpu.memory_space<vmem>>, %arg2: memref<1x32xf32, #tpu.memory_space<vmem>>, %arg3: memref<32x128xbf16, #tpu.memory_space<vmem>>, %arg4: memref<1x128xf32, #tpu.memory_space<vmem>>, %arg5: memref<128x32xbf16, #tpu.memory_space<vmem>>, %arg6: memref<1x32xf32, #tpu.memory_space<vmem>>, %arg7: memref<2x32xf32, #tpu.memory_space<vmem>>) attributes {dimension_semantics = [], scalar_prefetch = 0 : i64, scratch_operands = 0 : i64, tpu.core_type = #tpu.core_type<tc>} {
    %c0 = arith.constant 0 : index
    %c0_0 = arith.constant 0 : index
    %0 = vector.load %arg0[%c0, %c0_0] : memref<2x1xf32, #tpu.memory_space<vmem>>, vector<2x1xf32>
    %c0_1 = arith.constant 0 : index
    %c0_2 = arith.constant 0 : index
    %1 = vector.load %arg1[%c0_1, %c0_2] : memref<1x32xf32, #tpu.memory_space<vmem>>, vector<1x32xf32>
    %2 = vector.broadcast %0 : vector<2x1xf32> to vector<2x32xf32>
    %3 = vector.broadcast %1 : vector<1x32xf32> to vector<2x32xf32>
    %4 = arith.mulf %2, %3 : vector<2x32xf32>
    %c0_3 = arith.constant 0 : index
    %c0_4 = arith.constant 0 : index
    %5 = vector.load %arg2[%c0_3, %c0_4] : memref<1x32xf32, #tpu.memory_space<vmem>>, vector<1x32xf32>
    %6 = vector.broadcast %5 : vector<1x32xf32> to vector<2x32xf32>
    %7 = arith.addf %4, %6 : vector<2x32xf32>
    %8 = math.sin %7 : vector<2x32xf32>
    %9 = arith.truncf %8 : vector<2x32xf32> to vector<2x32xbf16>
    %c0_5 = arith.constant 0 : index
    %c0_6 = arith.constant 0 : index
    %10 = vector.load %arg3[%c0_5, %c0_6] : memref<32x128xbf16, #tpu.memory_space<vmem>>, vector<32x128xbf16>
    %cst = arith.constant dense<0.000000e+00> : vector<2x128xf32>
    %11 = tpu.matmul %9, %10, %cst {dimension_numbers = #tpu.dot_dimension_numbers<[1], [0], [0], [1], [0, 0, 1, 1], [], []>} : vector<2x32xbf16>, vector<32x128xbf16>, vector<2x128xf32> -> vector<2x128xf32>
    %c0_7 = arith.constant 0 : index
    %c0_8 = arith.constant 0 : index
    %12 = vector.load %arg4[%c0_7, %c0_8] : memref<1x128xf32, #tpu.memory_space<vmem>>, vector<1x128xf32>
    %13 = vector.broadcast %12 : vector<1x128xf32> to vector<2x128xf32>
    %14 = arith.addf %11, %13 : vector<2x128xf32>
    %cst_9 = arith.constant 0.000000e+00 : f32
    %15 = vector.broadcast %cst_9 : f32 to vector<2x128xf32>
    %16 = arith.maximumf %14, %15 : vector<2x128xf32>
    %17 = vector.broadcast %cst_9 : f32 to vector<2x128xf32>
    %18 = arith.subf %14, %17 : vector<2x128xf32>
    %19 = arith.cmpf one, %18, %18 : vector<2x128xf32>
    %20 = vector.broadcast %cst_9 : f32 to vector<2x128xf32>
    %21 = arith.addf %14, %20 : vector<2x128xf32>
    %22 = math.absf %18 : vector<2x128xf32>
    %cst_10 = arith.constant 0.000000e+00 : f32
    %23 = vector.broadcast %cst_10 : f32 to vector<2x128xf32>
    %24 = arith.subf %23, %22 : vector<2x128xf32>
    %25 = math.exp %24 : vector<2x128xf32>
    %26 = math.log1p %25 : vector<2x128xf32>
    %27 = arith.addf %16, %26 : vector<2x128xf32>
    %28 = arith.select %19, %21, %27 : vector<2x128xi1>, vector<2x128xf32>
    %29 = math.tanh %28 : vector<2x128xf32>
    %30 = arith.mulf %14, %29 : vector<2x128xf32>
    %31 = arith.truncf %30 : vector<2x128xf32> to vector<2x128xbf16>
    %c0_11 = arith.constant 0 : index
    %c0_12 = arith.constant 0 : index
    %32 = vector.load %arg5[%c0_11, %c0_12] : memref<128x32xbf16, #tpu.memory_space<vmem>>, vector<128x32xbf16>
    %cst_13 = arith.constant dense<0.000000e+00> : vector<2x32xf32>
    %33 = tpu.matmul %31, %32, %cst_13 {dimension_numbers = #tpu.dot_dimension_numbers<[1], [0], [0], [1], [0, 0, 1, 1], [], []>} : vector<2x128xbf16>, vector<128x32xbf16>, vector<2x32xf32> -> vector<2x32xf32>
    %c0_14 = arith.constant 0 : index
    %c0_15 = arith.constant 0 : index
    %34 = vector.load %arg6[%c0_14, %c0_15] : memref<1x32xf32, #tpu.memory_space<vmem>>, vector<1x32xf32>
    %35 = vector.broadcast %34 : vector<1x32xf32> to vector<2x32xf32>
    %36 = arith.addf %33, %35 : vector<2x32xf32>
    %c0_16 = arith.constant 0 : index
    %c0_17 = arith.constant 0 : index
    %37 = vector.load %arg7[%c0_16, %c0_17] : memref<2x32xf32, #tpu.memory_space<vmem>>, vector<2x32xf32>
    tpu.vector_store %arg7[%c0_16, %c0_17], %36 {strides = array<i32>} : memref<2x32xf32, #tpu.memory_space<vmem>>, vector<2x32xf32>,
    return
  }
}

</mosaic_0001>

<llo_original>
// kernel: tpu_custom_call.1
$region0: #{tpu_custom_call.1}
  #allocation0 [shape = 'u32[]', space=smem, size = 0x4, offset = 0x4, fixed_abs, tag = 'smem constant byte address 0x4 - core index']
  #allocation1 [shape = 'u32[72,128]{1,0:T(1,128)}', space=vmem, size = 0x9000, scoped, tag = 'internal scratch']
  %s0 = inlined_call_operand.vmem [shape: f32[2,1], index: 0, kind: input, shape index: {}]
  %s1 = inlined_call_operand.vmem [shape: f32[1,32], index: 1, kind: input, shape index: {}]
  %s2 = inlined_call_operand.vmem [shape: f32[1,32], index: 2, kind: input, shape index: {}]
  %s3 = inlined_call_operand.vmem [shape: bf16[32,128], index: 3, kind: input, shape index: {}]
  %s4 = inlined_call_operand.vmem [shape: f32[1,128], index: 4, kind: input, shape index: {}]
  %s5 = inlined_call_operand.vmem [shape: bf16[128,32], index: 5, kind: input, shape index: {}]
  %s6 = inlined_call_operand.vmem [shape: f32[1,32], index: 6, kind: input, shape index: {}]
  %s7 = inlined_call_operand.hbm [shape: f32[2,32], index: 7, kind: output, shape index: {}]
  %s8 = sld [smem:[#allocation0]]
  $region38: #{tpu_custom_call.1} parent=0
    _
  %s10 = ssub.s32 1, %s8
  %s11 = scalar_select 0, %s10, %s8
  $region1: #{tpu_custom_call.1} parent=0
    #allocation2 [shape = 'u8[1024]{0}', space=vmem, size = 0x400, scoped, tag = 'output window, operand 0, single buffered']
    #allocation3 [shape = 's32[1]{0}', space=sflag, size = 0x4, scoped, tag = 'scoped memory for tpu_custom_call.1']
    %12 = vsyncpa [#allocation3], 0
    // Predicated region
    $region2: #{tpu_custom_call.1} parent=1 // pred_check
      _
    $region3: #{tpu_custom_call.1} parent=1 // pred_check_branch
      %14 = sbr.rel (0) target = $region5
    $region4: #{tpu_custom_call.1} parent=1 // pred_region
      _
    $region5: #{tpu_custom_call.1} parent=1 // pred_fallthru
      _
    // Predicated region
    $region6: #{tpu_custom_call.1} parent=1 // pred_check
      _
    $region7: #{tpu_custom_call.1} parent=1 // pred_check_branch
      %16 = sbr.rel (0) target = $region9
    $region8: #{tpu_custom_call.1} parent=1 // pred_region
      _
    $region9: #{tpu_custom_call.1} parent=1 // pred_fallthru
      _
    // Predicated region
    $region10: #{tpu_custom_call.1} parent=1 // pred_check
      _
    $region11: #{tpu_custom_call.1} parent=1 // pred_check_branch
      %18 = sbr.rel (0) target = $region13
    $region12: #{tpu_custom_call.1} parent=1 // pred_region
      _
    $region13: #{tpu_custom_call.1} parent=1 // pred_fallthru
      _
    // Predicated region
    $region14: #{tpu_custom_call.1} parent=1 // pred_check
      _
    $region15: #{tpu_custom_call.1} parent=1 // pred_check_branch
      %20 = sbr.rel (0) target = $region17
    $region16: #{tpu_custom_call.1} parent=1 // pred_region
      _
    $region17: #{tpu_custom_call.1} parent=1 // pred_fallthru
      _
    // Predicated region
    $region18: #{tpu_custom_call.1} parent=1 // pred_check
      _
    $region19: #{tpu_custom_call.1} parent=1 // pred_check_branch
      %22 = sbr.rel (0) target = $region21
    $region20: #{tpu_custom_call.1} parent=1 // pred_region
      _
    $region21: #{tpu_custom_call.1} parent=1 // pred_fallthru
      _
    // Predicated region
    $region22: #{tpu_custom_call.1} parent=1 // pred_check
      _
    $region23: #{tpu_custom_call.1} parent=1 // pred_check_branch
      %24 = sbr.rel (0) target = $region25
    $region24: #{tpu_custom_call.1} parent=1 // pred_region
      _
    $region25: #{tpu_custom_call.1} parent=1 // pred_fallthru
      _
    // Predicated region
    $region26: #{tpu_custom_call.1} parent=1 // pred_check
      _
    $region27: #{tpu_custom_call.1} parent=1 // pred_check_branch
      %26 = sbr.rel (0) target = $region29
    $region28: #{tpu_custom_call.1} parent=1 // pred_region
      _
    $region29: #{tpu_custom_call.1} parent=1 // pred_fallthru
      _
    %v28 = vld [vmem:[%s0] sm:$0x3]
    %v29 = vld [vmem:[%s1] sm:$0x1]
    %31 = vset.pattern.permute.xlu0 0
    %32 = vperm.xlu0 %31, %v28
    %v33 = vpop.permute.xlu0 %32
    %v36 = vperm.slane %v29, 0
    %v38 = vmul.f32 %v33, %v36
    %v39 = vld [vmem:[%s2] sm:$0x1]
    %v41 = vperm.slane %v39, 0
    %v43 = vadd.f32 %v38, %v41
    %v44 = vand.u32 2147483647, %v43
    %vm45 = vcmp.le.f32.partialorder %v44, 0.7853982
    %vm46 = vcmp.lt.s32.totalorder %v43, 0
    %v47 = vand.u32 %v43, 2139095040
    %v48 = vshrl.u32 %v47, 23
    %v49 = vsub.s32 %v48, 127
    %v50 = vand.u32 2147483647, %v43
    %v51 = vand.u32 %v50, 8388607
    %v52 = vor.u32 %v51, 8388608
    %v53 = vsub.s32 0, %v52
    %v54 = vadd.s32 %v49, 1
    %vm55 = vcmp.gt.s32.totalorder %v54, 0
    %v56 = vsel %vm55, %v54, 0
    %v57 = vshrl.u32 %v56, 5
    %v58 = vand.u32 %v56, 31
    %v59 = vsub.s32 32, %v58
    %v60 = vshrl.u32 683565275, %v59
    %v61 = vshll.u32 683565275, %v58
    %v62 = vshrl.u32 2475754826, %v59
    %v63 = vor.u32 %v61, %v62
    %v64 = vshll.u32 2475754826, %v58
    %v65 = vshrl.u32 2131351028, %v59
    %v66 = vor.u32 %v64, %v65
    %v67 = vshll.u32 2131351028, %v58
    %v68 = vshrl.u32 2102212464, %v59
    %v69 = vor.u32 %v67, %v68
    %v70 = vshll.u32 2102212464, %v58
    %v71 = vshrl.u32 920167782, %v59
    %v72 = vor.u32 %v70, %v71
    %v73 = vshll.u32 920167782, %v58
    %v74 = vshrl.u32 1326507024, %v59
    %v75 = vor.u32 %v73, %v74
    %vm76 = vcmp.lt.s32.totalorder %v57, 1
    %vm77 = vcmp.lt.s32.totalorder %v57, 2
    %vm78 = vcmp.lt.s32.totalorder %v57, 3
    %vm79 = vcmp.lt.s32.totalorder %v57, 4
    %v80 = vsel %vm76, %v60, %v63
    %v81 = vsel %vm79, %v69, 2102212464
    %v82 = vsel %vm78, %v66, %v81
    %v83 = vsel %vm77, %v80, %v82
    %v84 = vsel %vm76, %v63, %v66
    %v85 = vsel %vm79, %v72, 920167782
    %v86 = vsel %vm78, %v69, %v85
    %v87 = vsel %vm77, %v84, %v86
    %v88 = vsel %vm76, %v66, %v69
    %v89 = vsel %vm79, %v75, 1326507024
    %v90 = vsel %vm78, %v72, %v89
    %v91 = vsel %vm77, %v88, %v90
    %v92 = vshll.u32 %v52, 8
    %v93 = vand.u32 %v92, 65535
    %v94 = vshrl.u32 %v92, 16
    %v95 = vand.u32 %v91, 65535
    %v96 = vshrl.u32 %v91, 16
    %v97 = vmul.u32 %v93, %v95
    %v98 = vmul.u32 %v93, %v96
    %v99 = vmul.u32 %v94, %v95
    %v100 = vmul.u32 %v94, %v96
    %v101 = vshll.u32 %v98, 16
    %v102 = vshrl.u32 %v98, 16
    %v103 = vshll.u32 %v99, 16
    %v104 = vshrl.u32 %v99, 16
    %vm105 = vc.u32 %v97, %v101
    %v106 = vsel %vm105, 1, 0
    %v107 = vadd.s32 %v97, %v101
    %v108 = vadd.s32 %v100, %v106
    %vm109 = vc.u32 %v107, %v103
    %v110 = vsel %vm109, 1, 0
    %v111 = vadd.s32 %v107, %v103
    %v112 = vadd.s32 %v108, %v110
    %v113 = vadd.s32 %v112, %v102
    %v114 = vadd.s32 %v113, %v104
    %v115 = vand.u32 %v92, 65535
    %v116 = vshrl.u32 %v92, 16
    %v117 = vand.u32 %v87, 65535
    %v118 = vshrl.u32 %v87, 16
    %v119 = vmul.u32 %v115, %v117
    %v120 = vmul.u32 %v115, %v118
    %v121 = vmul.u32 %v116, %v117
    %v122 = vmul.u32 %v116, %v118
    %v123 = vshll.u32 %v120, 16
    %v124 = vshrl.u32 %v120, 16
    %v125 = vshll.u32 %v121, 16
    %v126 = vshrl.u32 %v121, 16
    %vm127 = vc.u32 %v119, %v123
    %v128 = vsel %vm127, 1, 0
    %v129 = vadd.s32 %v119, %v123
    %v130 = vadd.s32 %v122, %v128
    %vm131 = vc.u32 %v129, %v125
    %v132 = vsel %vm131, 1, 0
    %v133 = vadd.s32 %v129, %v125
    %v134 = vadd.s32 %v130, %v132
    %v135 = vadd.s32 %v134, %v124
    %v136 = vadd.s32 %v135, %v126
    %v137 = vmul.u32 %v92, %v83
    %v138 = vadd.s32 %v114, %v133
    %vm139 = vc.u32 %v114, %v133
    %v140 = vadd.s32 %v136, 1
    %v141 = vsel %vm139, %v140, %v136
    %v142 = vadd.s32 %v137, %v141
    %v143 = vadd.s32 %v142, 536870912
    %v144 = vshrl.u32 %v143, 30
    %v145 = vshll.u32 %v144, 30
    %v146 = vsub.s32 %v142, %v145
    %vm147 = vcmp.lt.s32.totalorder %v146, 0
    %v148 = vsub.s32 0, %v146
    %v149 = vsel %vm147, %v148, %v146
    %v150 = vclz %v149
    %v151 = vsub.s32 %v150, 2
    %vm152 = vcmp.gt.s32.totalorder 0, %v151
    %v153 = vsel %vm152, 0, %v151
    %v154 = vsub.s32 32, %v153
    %v155 = vshll.u32 %v146, %v153
    %v156 = vshrl.u32 %v138, %v154
    %v157 = vor.u32 %v155, %v156
    %v158 = vsub.s32 4294967266, %v153
    %v159 = vadd.s32 %v158, 127
    %v160 = vshll.u32 %v159, 23
    %v161 = vor.u32 4788187, %v160
    %v162 = vand.u32 2147483647, %v161
    %v164 = vcvt.s32.f32 %v157
    %v165 = vmul.f32 %v164, %v162
    %v166 = vxor.u32 %v165, 2147483648
    %v167 = vsel %vm46, %v166, %v165
    %v168 = vsub.s32 4, %v144
    %v169 = vsel %vm46, %v168, %v144
    %v170 = vsel %vm45, %v43, %v167
    %v171 = vsel %vm45, 0, %v169
    %v172 = vmul.f32 %v170, %v170
    %v173 = vmul.f32 %v172, -0.001358992
    %v174 = vadd.f32 %v173, 0.041655596
    %v175 = vmul.f32 %v172, %v174
    %v176 = vadd.f32 %v175, -0.4999988
    %v177 = vmul.f32 %v172, %v176
    %v178 = vadd.f32 1.0, %v177
    %v179 = vmul.f32 %v170, %v170
    %v180 = vmul.f32 %v179, -0.00019511016
    %v181 = vadd.f32 %v180, 0.008332121
    %v182 = vmul.f32 %v179, %v181
    %v183 = vadd.f32 %v182, -0.16666654
    %v184 = vmul.f32 %v179, %v183
    %v185 = vadd.f32 %v184, 1.0
    %v186 = vmul.f32 %v185, %v170
    %vm187 = vweird.f32 %v43
    %v188 = vadd.s32 %v171, 3
    %v189 = vand.u32 %v188, 3
    %vm190 = vcmp.lt.s32.totalorder %v189, 2
    %vm191 = vcmp.eq.s32.totalorder %v189, 0
    %v192 = vxor.u32 %v186, 2147483648
    %v193 = vsel %vm191, %v178, %v192
    %vm194 = vcmp.eq.s32.totalorder %v189, 2
    %v195 = vxor.u32 %v178, 2147483648
    %v196 = vsel %vm194, %v195, %v186
    %v197 = vsel %vm190, %v193, %v196
    %v198 = vsel %vm187, nan, %v197
    %v199 = vpack.c.bf16 %v198, %v198
    %v200 = vld [vmem:[%s3] sm:$0xf]
    %v201 = vld [vmem:[%s3 + $0x4] sm:$0xf]
    %v202 = vld [vmem:[%s3 + $0x8] sm:$0xf]
    %v203 = vld [vmem:[%s3 + $0xc] sm:$0xf]
    %v204 = vld [vmem:[%s4] sm:$0x1]
    %v206 = vperm.slane %v204, 0
    %v212 = vunpack.c.l.b16 %v200
    %v213 = vunpack.c.l.b16 %v201
    %v214 = vunpack.c.l.b16 %v202
    %v215 = vunpack.c.l.b16 %v203
    %v216 = vpack.c.b16 %v213, %v212
    %v217 = vpack.c.b16 %v215, %v214
    %vm220 = vcmask 261120
    %v222 = vsel %vm220, %v199, 0
    %224 = vmatpush.bf16.msra.mxu0 0
    %225 = vmatpush.bf16.msra.mxu0 0
    %226 = vmatpush.bf16.msra.mxu0 0
    %227 = vmatpush.bf16.msra.mxu0 0
    %228 = vmatpush.bf16.msra.mxu0 0
    %229 = vmatpush.bf16.msra.mxu0 0
    %230 = vmatpush.bf16.msra.mxu0 %v217
    %231 = vmatpush.bf16.msra.mxu0 %v216
    %232 = vmatmul.bf16.gmra.mxu0 %v222
    %v233 = vpop.f32.mrf.mxu0
    %v234 = vadd.f32 %v206, %v233
    %v235 = vpop.f32.mrf.mxu0
    %236 = vdwg.mxu0
    %v237 = vmax.f32 %v234, 0.0
    %vm238 = vcmp.ne.f32.partialorder %v234, %v234
    %v239 = vadd.f32 %v234, 0.0
    %v240 = vand.u32 2147483647, %v234
    %v241 = vsub.f32 0.0, %v240
    %v242 = vmul.f32 %v241, 1.442695
    %v243 = vpow.pop %v242
    %v244 = vadd.f32 %v243, 1.0
    %v245 = vlog2.pop %v244
    %v246 = vmul.f32 %v245, 0.6931472
    %v247 = vmul.f32 -0.5, %v243
    %v248 = vadd.f32 %v247, 1.0
    %v249 = vmul.f32 %v248, %v243
    %v250 = vand.u32 2147483647, %v243
    %vm251 = vcmp.lt.f32.partialorder %v250, 0.0004427343
    %v252 = vsel %vm251, %v249, %v246
    %v253 = vadd.f32 %v237, %v252
    %v254 = vsel %vm238, %v239, %v253
    %v255 = vtanh.pop %v254
    %v256 = vmul.f32 %v234, %v255
    %v257 = vpack.c.bf16 %v256, %v256
    %v258 = vld [vmem:[%s5] sm:$0xf]
    %v259 = vld [vmem:[%s5 + $0x4] sm:$0xf]
    %v260 = vld [vmem:[%s5 + $0x8] sm:$0xf]
    %v261 = vld [vmem:[%s5 + $0xc] sm:$0xf]
    %v262 = vld [vmem:[%s5 + $0x10] sm:$0xf]
    %v263 = vld [vmem:[%s5 + $0x14] sm:$0xf]
    %v264 = vld [vmem:[%s5 + $0x18] sm:$0xf]
    %v265 = vld [vmem:[%s5 + $0x1c] sm:$0xf]
    %v266 = vld [vmem:[%s5 + $0x20] sm:$0xf]
    %v267 = vld [vmem:[%s5 + $0x24] sm:$0xf]
    %v268 = vld [vmem:[%s5 + $0x28] sm:$0xf]
    %v269 = vld [vmem:[%s5 + $0x2c] sm:$0xf]
    %v270 = vld [vmem:[%s5 + $0x30] sm:$0xf]
    %v271 = vld [vmem:[%s5 + $0x34] sm:$0xf]
    %v272 = vld [vmem:[%s5 + $0x38] sm:$0xf]
    %v273 = vld [vmem:[%s5 + $0x3c] sm:$0xf]
    %v274 = vld [vmem:[%s6] sm:$0x1]
    %v276 = vperm.slane %v274, 0
    %v294 = vunpack.c.l.b16 %v258
    %v295 = vunpack.c.l.b16 %v259
    %v296 = vunpack.c.l.b16 %v260
    %v297 = vunpack.c.l.b16 %v261
    %v298 = vunpack.c.l.b16 %v262
    %v299 = vunpack.c.l.b16 %v263
    %v300 = vunpack.c.l.b16 %v264
    %v301 = vunpack.c.l.b16 %v265
    %v302 = vunpack.c.l.b16 %v266
    %v303 = vunpack.c.l.b16 %v267
    %v304 = vunpack.c.l.b16 %v268
    %v305 = vunpack.c.l.b16 %v269
    %v306 = vunpack.c.l.b16 %v270
    %v307 = vunpack.c.l.b16 %v271
    %v308 = vunpack.c.l.b16 %v272
    %v309 = vunpack.c.l.b16 %v273
    %v310 = vpack.c.b16 %v295, %v294
    %v311 = vpack.c.b16 %v297, %v296
    %v312 = vpack.c.b16 %v299, %v298
    %v313 = vpack.c.b16 %v301, %v300
    %v314 = vpack.c.b16 %v303, %v302
    %v315 = vpack.c.b16 %v305, %v304
    %v316 = vpack.c.b16 %v307, %v306
    %v317 = vpack.c.b16 %v309, %v308
    %326 = vmatpush.bf16.msra.mxu0 %v317
    %327 = vmatpush.bf16.msra.mxu0 %v316
    %328 = vmatpush.bf16.msra.mxu0 %v315
    %329 = vmatpush.bf16.msra.mxu0 %v314
    %330 = vmatpush.bf16.msra.mxu0 %v313
    %331 = vmatpush.bf16.msra.mxu0 %v312
    %332 = vmatpush.bf16.msra.mxu0 %v311
    %333 = vmatpush.bf16.msra.mxu0 %v310
    %334 = vmatmul.bf16.gmra.mxu0 %v257
    %v335 = vpop.f32.mrf.mxu0
    %v336 = vadd.f32 %v276, %v335
    %v337 = vpop.f32.mrf.mxu0
    %338 = vdwg.mxu0
    %vm339 = vcmask 254976
    %340 = vst.msk [vmem:[#allocation2] sm:$0x3] %vm339, %v336
    // Predicated region
    $region30: #{tpu_custom_call.1} parent=1 // pred_check
      _
    $region31: #{tpu_custom_call.1} parent=1 // pred_check_branch
      %342 = sbr.rel (0) target = $region33
    $region32: #{tpu_custom_call.1} parent=1 // pred_region
      %344 = vsyncadd [#allocation3], 0
      %s346 = sshll.u32 [#allocation2], 4
      %s347 = int_to_ptr.vmem [resolvable:$true] %s346
      %s348 = sshll.u32 %s7, 4
      %s349 = int_to_ptr.hbm [resolvable:$true] %s348
      %351 = dma.vmem_to_hbm [thread:$0]  %s347, 32, %s349, [#allocation3]
    $region33: #{tpu_custom_call.1} parent=1 // pred_fallthru
      _
    // Predicated region
    $region34: #{tpu_custom_call.1} parent=1 // pred_check
      _
    $region35: #{tpu_custom_call.1} parent=1 // pred_check_branch
      %353 = sbr.rel (0) target = $region37
    $region36: #{tpu_custom_call.1} parent=1 // pred_region
      %355 = dma.done [#allocation3], 32
    $region37: #{tpu_custom_call.1} parent=1 // pred_fallthru
      _
    %356 = vsyncpa [#allocation3], 1

</llo_original>
